<compile_context>
chip_gen: v7x
topology: tpu7x:2x2x1
jax: 0.10.0
libtpu: 0.0.40
codegen_flags: <defaults>
</compile_context>

<pallas_src>
import functools
import math

import jax
import jax.numpy as jnp
from jax import lax
from jax.experimental import pallas as pl
from jax.experimental.pallas import tpu as pltpu

NEG_INF = -1e30  # finite mask value: avoids inf-inf -> NaN hazards


def _layernorm(v, w, b, eps=1e-5):
    mu = jnp.mean(v, axis=-1, keepdims=True)
    var = jnp.mean((v - mu) ** 2, axis=-1, keepdims=True)
    return (v - mu) * lax.rsqrt(var + eps) * w + b


# ---------------- pass 1: LN1 + fused QKV projection ----------------
def qkv_kernel(x_ref, ln1w_ref, ln1b_ref, attw_ref, attb_ref, qkv_ref, *, n_head):
    x = x_ref[0]                                   # (TQ, C) f32
    C = x.shape[-1]
    hd = C // n_head
    scale = 1.0 / math.sqrt(hd)

    h = _layernorm(x, ln1w_ref[...], ln1b_ref[...])                 # f32 stats
    qkv = jnp.dot(h.astype(jnp.bfloat16), attw_ref[...],
                  preferred_element_type=jnp.float32) + attb_ref[...]
    # fold the 1/sqrt(hd) softmax scale into q (first C lanes), one VPU multiply
    col = lax.broadcasted_iota(jnp.int32, (1, 3 * C), 1)
    qkv = qkv * jnp.where(col < C, scale, 1.0)
    qkv_ref[0] = qkv.astype(qkv_ref.dtype)                          # bf16 store


# -------- pass 2: flash attention + proj + residual + LN2 + MLP + residual --------
def attn_mlp_kernel(q_ref, k_ref, v_ref, x_ref,
                    projw_ref, projb_ref,
                    ln2w_ref, ln2b_ref,
                    fcw_ref, fcb_ref,
                    mpw_ref, mpb_ref,
                    o_ref,
                    m_scr, l_scr, acc_scr):
    H, TQ, hd = q_ref.shape[1], q_ref.shape[2], q_ref.shape[3]
    TK = k_ref.shape[2]
    C = x_ref.shape[2]
    qi = pl.program_id(1)
    kv = pl.program_id(2)

    @pl.when(kv == 0)
    def _init():
        m_scr[...] = jnp.full_like(m_scr, NEG_INF)
        l_scr[...] = jnp.zeros_like(l_scr)
        acc_scr[...] = jnp.zeros_like(acc_scr)

    # skip KV tiles that lie entirely above the causal diagonal
    @pl.when(kv * TK <= qi * TQ + (TQ - 1))
    def _update():
        q = q_ref[0]                                # (H, TQ, hd) bf16, q pre-scaled
        k = k_ref[0]                                # (H, TK, hd) bf16
        v = v_ref[0]                                # (H, TK, hd) bf16
        s = jnp.einsum('hqd,hkd->hqk', q, k,
                       preferred_element_type=jnp.float32)          # (H, TQ, TK) f32

        row = qi * TQ + lax.broadcasted_iota(jnp.int32, (H, TQ, TK), 1)
        col = kv * TK + lax.broadcasted_iota(jnp.int32, (H, TQ, TK), 2)
        s = jnp.where(col <= row, s, NEG_INF)

        m_prev = m_scr[...]
        m_new = jnp.maximum(m_prev, jnp.max(s, axis=-1, keepdims=True))
        alpha = jnp.exp(m_prev - m_new)
        p = jnp.exp(s - m_new)
        l_scr[...] = alpha * l_scr[...] + jnp.sum(p, axis=-1, keepdims=True)
        acc_scr[...] = alpha * acc_scr[...] + jnp.einsum(
            'hqk,hkd->hqd', p.astype(jnp.bfloat16), v,
            preferred_element_type=jnp.float32)
        m_scr[...] = m_new

    @pl.when(kv == pl.num_programs(2) - 1)
    def _finalize():
        inv_l = pl.reciprocal(l_scr[...], approx=True)               # EUP slot
        yh = (acc_scr[...] * inv_l).astype(jnp.bfloat16)             # (H, TQ, hd)

        # output projection with proj_w viewed as (H, hd, C): no transpose needed
        att = jnp.zeros((TQ, C), jnp.float32)
        for h in range(H):
            att = att + jnp.dot(yh[h], projw_ref[h],
                                preferred_element_type=jnp.float32)
        x1 = x_ref[0] + att + projb_ref[...]                         # residual 1 (f32)

        h2 = _layernorm(x1, ln2w_ref[...], ln2b_ref[...])            # f32 stats
        m = jnp.dot(h2.astype(jnp.bfloat16), fcw_ref[...],
                    preferred_element_type=jnp.float32) + fcb_ref[...]
        m = jax.nn.gelu(m, approximate=False)                        # exact erf GELU, f32
        m = jnp.dot(m.astype(jnp.bfloat16), mpw_ref[...],
                    preferred_element_type=jnp.float32) + mpb_ref[...]
        o_ref[0] = (x1 + m).astype(o_ref.dtype)                      # residual 2


def gpt_block(x, params, *, n_head):
    B, T, C = x.shape
    hd = C // n_head
    tile = 128 if T % 128 == 0 else T
    nq = T // tile
    nkv = T // tile
    vmem_limit = 64 * 1024 * 1024   # explicit scoped VMEM (safe on v5e/v6e/v7x)

    # bf16 weights for MXU feeding / halved DMA; biases & LN params stay f32.
    ln1_w, ln1_b = params["ln1_w"], params["ln1_b"]
    ln2_w, ln2_b = params["ln2_w"], params["ln2_b"]
    attn_w = params["attn_w"].astype(jnp.bfloat16)
    attn_b = params["attn_b"]
    proj_w = params["proj_w"].astype(jnp.bfloat16).reshape(n_head, hd, C)
    proj_b = params["proj_b"]
    fc_w = params["fc_w"].astype(jnp.bfloat16)
    fc_b = params["fc_b"]
    mp_w = params["mp_w"].astype(jnp.bfloat16)
    mp_b = params["mp_b"]

    def full_spec(arr):
        nd = arr.ndim
        return pl.BlockSpec(arr.shape, lambda *idx, _nd=nd: (0,) * _nd)

    # ---- pass 1: LN1 + QKV projection ----
    qkv = pl.pallas_call(
        functools.partial(qkv_kernel, n_head=n_head),
        out_shape=jax.ShapeDtypeStruct((B, T, 3 * C), jnp.bfloat16),
        grid_spec=pltpu.PrefetchScalarGridSpec(
            num_scalar_prefetch=0,
            grid=(B, nq),
            in_specs=[pl.BlockSpec((1, tile, C), lambda b, q: (b, q, 0)),
                      full_spec(ln1_w), full_spec(ln1_b),
                      full_spec(attn_w), full_spec(attn_b)],
            out_specs=pl.BlockSpec((1, tile, 3 * C), lambda b, q: (b, q, 0)),
        ),
        compiler_params=pltpu.CompilerParams(
            dimension_semantics=("parallel", "parallel"),
            vmem_limit_bytes=vmem_limit),
    )(x, ln1_w, ln1_b, attn_w, attn_b)

    # layout plumbing (XLA, one-time relayout): split heads -> (B, H, T, hd)
    def heads(t):
        return t.reshape(B, T, n_head, hd).transpose(0, 2, 1, 3)
    q = heads(qkv[..., 0 * C:1 * C])
    k = heads(qkv[..., 1 * C:2 * C])
    v = heads(qkv[..., 2 * C:3 * C])

    weight_args = (proj_w, proj_b, ln2_w, ln2_b, fc_w, fc_b, mp_w, mp_b)

    # ---- pass 2: flash attention + proj + residuals + LN2 + MLP ----
    out = pl.pallas_call(
        attn_mlp_kernel,
        out_shape=jax.ShapeDtypeStruct((B, T, C), x.dtype),
        grid_spec=pltpu.PrefetchScalarGridSpec(
            num_scalar_prefetch=0,
            grid=(B, nq, nkv),
            in_specs=[pl.BlockSpec((1, n_head, tile, hd), lambda b, qi, kv: (b, 0, qi, 0)),
                      pl.BlockSpec((1, n_head, tile, hd), lambda b, qi, kv: (b, 0, kv, 0)),
                      pl.BlockSpec((1, n_head, tile, hd), lambda b, qi, kv: (b, 0, kv, 0)),
                      pl.BlockSpec((1, tile, C), lambda b, qi, kv: (b, qi, 0))]
                     + [full_spec(w) for w in weight_args],
            out_specs=pl.BlockSpec((1, tile, C), lambda b, qi, kv: (b, qi, 0)),
            scratch_shapes=[pltpu.VMEM((n_head, tile, 1), jnp.float32),   # m
                            pltpu.VMEM((n_head, tile, 1), jnp.float32),   # l
                            pltpu.VMEM((n_head, tile, hd), jnp.float32)]  # acc
        ),
        compiler_params=pltpu.CompilerParams(
            dimension_semantics=("parallel", "parallel", "arbitrary"),
            vmem_limit_bytes=vmem_limit),
    )(q, k, v, x, *weight_args)
    return out


# ----------------- pure-JAX f32 reference for verification -----------------
def gpt_block_ref(x, params, *, n_head):
    B, T, C = x.shape
    hd = C // n_head

    def ln(v, w, b):
        mu = jnp.mean(v, axis=-1, keepdims=True)
        var = jnp.mean((v - mu) ** 2, axis=-1, keepdims=True)
        return (v - mu) / jnp.sqrt(var + 1e-5) * w + b

    h = ln(x, params["ln1_w"], params["ln1_b"])
    qkv = h @ params["attn_w"] + params["attn_b"]
    q, k, v = jnp.split(qkv, 3, axis=-1)
    q = q.reshape(B, T, n_head, hd).transpose(0, 2, 1, 3)
    k = k.reshape(B, T, n_head, hd).transpose(0, 2, 1, 3)
    v = v.reshape(B, T, n_head, hd).transpose(0, 2, 1, 3)
    att = jnp.einsum("bhtd,bhsd->bhts", q, k) / math.sqrt(hd)
    mask = jnp.tril(jnp.ones((T, T), bool))
    att = jnp.where(mask, att, -jnp.inf)
    att = jax.nn.softmax(att, axis=-1)
    y = jnp.einsum("bhts,bhsd->bhtd", att, v)
    y = y.transpose(0, 2, 1, 3).reshape(B, T, C)
    y = y @ params["proj_w"] + params["proj_b"]
    x = x + y
    h2 = ln(x, params["ln2_w"], params["ln2_b"])
    m = jax.nn.gelu(h2 @ params["fc_w"] + params["fc_b"], approximate=False)
    m = m @ params["mp_w"] + params["mp_b"]
    return x + m


def init_params(key, n_embd):
    ks = jax.random.split(key, 8)
    C = n_embd
    s = 0.02
    return {
        "ln1_w": jnp.ones((1, C), jnp.float32),
        "ln1_b": jnp.zeros((1, C), jnp.float32),
        "ln2_w": jnp.ones((1, C), jnp.float32),
        "ln2_b": jnp.zeros((1, C), jnp.float32),
        "attn_w": s * jax.random.normal(ks[0], (C, 3 * C), jnp.float32),
        "attn_b": s * jax.random.normal(ks[1], (1, 3 * C), jnp.float32),
        "proj_w": s * jax.random.normal(ks[2], (C, C), jnp.float32),
        "proj_b": s * jax.random.normal(ks[3], (1, C), jnp.float32),
        "fc_w":   s * jax.random.normal(ks[4], (C, 4 * C), jnp.float32),
        "fc_b":   s * jax.random.normal(ks[5], (1, 4 * C), jnp.float32),
        "mp_w":   s * jax.random.normal(ks[6], (4 * C, C), jnp.float32),
        "mp_b":   s * jax.random.normal(ks[7], (1, C), jnp.float32),
    }


if __name__ == "__main__":
    # small but tiling-exercising config: batch=2, seq=256, n_embd=128, n_head=4
    # (grid = (2, 2, 2) for the attention pass; C is a multiple of 128 -> lane-dense stores)
    B, T, C, NH = 2, 256, 128, 4
    key = jax.random.PRNGKey(0)
    kx, kp = jax.random.split(key)
    x = jax.random.normal(kx, (B, T, C), jnp.float32)
    params = init_params(kp, C)

    out = jax.block_until_ready(gpt_block(x, params, n_head=NH))
    ref = gpt_block_ref(x, params, n_head=NH)

    assert out.shape == (B, T, C)
    err = float(jnp.max(jnp.abs(out - ref)))
    # bf16 MXU operands with f32 accumulation: expect ~1e-3 level error
    assert err < 2e-2, f"max abs diff = {err}"

    print("KERNEL_OK")
</pallas_src>

<mosaic_0001>
module attributes {stable_mosaic.version = 11 : i64} {
  func.func @qkv_kernel(%arg0: i32, %arg1: i32, %arg2: memref<1x128x128xf32, #tpu.memory_space<vmem>>, %arg3: memref<1x128xf32, #tpu.memory_space<vmem>>, %arg4: memref<1x128xf32, #tpu.memory_space<vmem>>, %arg5: memref<128x384xbf16, #tpu.memory_space<vmem>>, %arg6: memref<1x384xf32, #tpu.memory_space<vmem>>, %arg7: memref<1x128x384xbf16, #tpu.memory_space<vmem>>) attributes {dimension_semantics = [#tpu.dimension_semantics<parallel>, #tpu.dimension_semantics<parallel>], iteration_bounds = array<i64: 2, 2>, scalar_prefetch = 0 : i64, scratch_operands = 0 : i64, tpu.core_type = #tpu.core_type<tc>, window_params = [{transform_indices = @transform_0, window_bounds = array<i64: 1, 128, 128>}, {pipeline_mode = #tpu.pipeline_mode<synchronous>, transform_indices = @transform_1, window_bounds = array<i64: 1, 128>}, {pipeline_mode = #tpu.pipeline_mode<synchronous>, transform_indices = @transform_2, window_bounds = array<i64: 1, 128>}, {pipeline_mode = #tpu.pipeline_mode<synchronous>, transform_indices = @transform_3, window_bounds = array<i64: 128, 384>}, {pipeline_mode = #tpu.pipeline_mode<synchronous>, transform_indices = @transform_4, window_bounds = array<i64: 1, 384>}, {transform_indices = @transform_5, window_bounds = array<i64: 1, 128, 384>}]} {
    %c0 = arith.constant 0 : index
    %c0_0 = arith.constant 0 : index
    %c0_1 = arith.constant 0 : index
    %0 = vector.load %arg2[%c0, %c0_0, %c0_1] : memref<1x128x128xf32, #tpu.memory_space<vmem>>, vector<1x128x128xf32>
    %1 = vector.shape_cast %0 : vector<1x128x128xf32> to vector<128x128xf32>
    %c0_2 = arith.constant 0 : index
    %c0_3 = arith.constant 0 : index
    %2 = vector.load %arg3[%c0_2, %c0_3] : memref<1x128xf32, #tpu.memory_space<vmem>>, vector<1x128xf32>
    %c0_4 = arith.constant 0 : index
    %c0_5 = arith.constant 0 : index
    %3 = vector.load %arg4[%c0_4, %c0_5] : memref<1x128xf32, #tpu.memory_space<vmem>>, vector<1x128xf32>
    %cst = arith.constant dense<0.000000e+00> : vector<128xf32>
    %4 = vector.multi_reduction <add>, %1, %cst [1] : vector<128x128xf32> to vector<128xf32>
    %5 = vector.shape_cast %4 : vector<128xf32> to vector<128x1xf32>
    %cst_6 = arith.constant 1.280000e+02 : f32
    %6 = vector.broadcast %cst_6 : f32 to vector<128x1xf32>
    %7 = arith.divf %5, %6 : vector<128x1xf32>
    %8 = vector.broadcast %7 : vector<128x1xf32> to vector<128x128xf32>
    %9 = arith.subf %1, %8 : vector<128x128xf32>
    %10 = arith.mulf %9, %9 : vector<128x128xf32>
    %cst_7 = arith.constant dense<0.000000e+00> : vector<128xf32>
    %11 = vector.multi_reduction <add>, %10, %cst_7 [1] : vector<128x128xf32> to vector<128xf32>
    %12 = vector.shape_cast %11 : vector<128xf32> to vector<128x1xf32>
    %cst_8 = arith.constant 1.280000e+02 : f32
    %13 = vector.broadcast %cst_8 : f32 to vector<128x1xf32>
    %14 = arith.divf %12, %13 : vector<128x1xf32>
    %15 = vector.broadcast %7 : vector<128x1xf32> to vector<128x128xf32>
    %16 = arith.subf %1, %15 : vector<128x128xf32>
    %cst_9 = arith.constant 9.99999974E-6 : f32
    %17 = vector.broadcast %cst_9 : f32 to vector<128x1xf32>
    %18 = arith.addf %14, %17 : vector<128x1xf32>
    %19 = math.rsqrt %18 : vector<128x1xf32>
    %20 = vector.broadcast %19 : vector<128x1xf32> to vector<128x128xf32>
    %21 = arith.mulf %16, %20 : vector<128x128xf32>
    %22 = vector.broadcast %2 : vector<1x128xf32> to vector<128x128xf32>
    %23 = arith.mulf %21, %22 : vector<128x128xf32>
    %24 = vector.broadcast %3 : vector<1x128xf32> to vector<128x128xf32>
    %25 = arith.addf %23, %24 : vector<128x128xf32>
    %26 = arith.truncf %25 : vector<128x128xf32> to vector<128x128xbf16>
    %c0_10 = arith.constant 0 : index
    %c0_11 = arith.constant 0 : index
    %27 = vector.load %arg5[%c0_10, %c0_11] : memref<128x384xbf16, #tpu.memory_space<vmem>>, vector<128x384xbf16>
    %cst_12 = arith.constant dense<0.000000e+00> : vector<128x384xf32>
    %28 = tpu.matmul %26, %27, %cst_12 {dimension_numbers = #tpu.dot_dimension_numbers<[1], [0], [0], [1], [0, 0, 1, 1], [], []>} : vector<128x128xbf16>, vector<128x384xbf16>, vector<128x384xf32> -> vector<128x384xf32>
    %c0_13 = arith.constant 0 : index
    %c0_14 = arith.constant 0 : index
    %29 = vector.load %arg6[%c0_13, %c0_14] : memref<1x384xf32, #tpu.memory_space<vmem>>, vector<1x384xf32>
    %30 = vector.broadcast %29 : vector<1x384xf32> to vector<128x384xf32>
    %31 = arith.addf %28, %30 : vector<128x384xf32>
    %32 = tpu.iota {dimensions = array<i32: 1>} : vector<1x384xi32>
    %c128_i32 = arith.constant 128 : i32
    %33 = vector.broadcast %c128_i32 : i32 to vector<1x384xi32>
    %34 = arith.cmpi slt, %32, %33 : vector<1x384xi32>
    %cst_15 = arith.constant 0.176776692 : f32
    %cst_16 = arith.constant 1.000000e+00 : f32
    %35 = vector.broadcast %cst_15 : f32 to vector<1x384xf32>
    %36 = vector.broadcast %cst_16 : f32 to vector<1x384xf32>
    %37 = arith.select %34, %35, %36 : vector<1x384xi1>, vector<1x384xf32>
    %38 = vector.broadcast %37 : vector<1x384xf32> to vector<128x384xf32>
    %39 = arith.mulf %31, %38 : vector<128x384xf32>
    %40 = arith.truncf %39 : vector<128x384xf32> to vector<128x384xbf16>
    %c0_17 = arith.constant 0 : index
    %c0_18 = arith.constant 0 : index
    %c0_19 = arith.constant 0 : index
    %41 = vector.load %arg7[%c0_17, %c0_18, %c0_19] : memref<1x128x384xbf16, #tpu.memory_space<vmem>>, vector<1x128x384xbf16>
    %42 = vector.shape_cast %41 : vector<1x128x384xbf16> to vector<128x384xbf16>
    %43 = vector.shape_cast %40 : vector<128x384xbf16> to vector<1x128x384xbf16>
    tpu.vector_store %arg7[%c0_17, %c0_18, %c0_19], %43 {strides = array<i32>} : memref<1x128x384xbf16, #tpu.memory_space<vmem>>, vector<1x128x384xbf16>,
    return
  }
  func.func @transform_0(%arg0: i32, %arg1: i32) -> (i32, i32, i32) {
    %c0_i32 = arith.constant 0 : i32
    %c0_i32_0 = arith.constant 0 : i32
    return %arg0, %arg1, %c0_i32 : i32, i32, i32
  }
  func.func @transform_1(%arg0: i32, %arg1: i32) -> (i32, i32) {
    %c0_i32 = arith.constant 0 : i32
    %c0_i32_0 = arith.constant 0 : i32
    %c0_i32_1 = arith.constant 0 : i32
    return %c0_i32, %c0_i32_0 : i32, i32
  }
  func.func @transform_2(%arg0: i32, %arg1: i32) -> (i32, i32) {
    %c0_i32 = arith.constant 0 : i32
    %c0_i32_0 = arith.constant 0 : i32
    %c0_i32_1 = arith.constant 0 : i32
    return %c0_i32, %c0_i32_0 : i32, i32
  }
  func.func @transform_3(%arg0: i32, %arg1: i32) -> (i32, i32) {
    %c0_i32 = arith.constant 0 : i32
    %c0_i32_0 = arith.constant 0 : i32
    %c0_i32_1 = arith.constant 0 : i32
    return %c0_i32, %c0_i32_0 : i32, i32
  }
  func.func @transform_4(%arg0: i32, %arg1: i32) -> (i32, i32) {
    %c0_i32 = arith.constant 0 : i32
    %c0_i32_0 = arith.constant 0 : i32
    %c0_i32_1 = arith.constant 0 : i32
    return %c0_i32, %c0_i32_0 : i32, i32
  }
  func.func @transform_5(%arg0: i32, %arg1: i32) -> (i32, i32, i32) {
    %c0_i32 = arith.constant 0 : i32
    %c0_i32_0 = arith.constant 0 : i32
    return %arg0, %arg1, %c0_i32 : i32, i32, i32
  }
}

</mosaic_0001>

<llo_original>
// kernel: tpu_custom_call.1
$region0: #{tpu_custom_call.1}
  #allocation0 [shape = 'u32[]', space=smem, size = 0x4, offset = 0x4, fixed_abs, tag = 'smem constant byte address 0x4 - core index']
  #allocation1 [shape = 'u32[144,128]{1,0:T(1,128)}', space=vmem, size = 0x12000, scoped, tag = 'internal scratch']
  %s0 = inlined_call_operand.hbm [shape: f32[2,256,128], index: 0, kind: input, shape index: {}]
  %s1 = inlined_call_operand.hbm [shape: f32[1,128], index: 1, kind: input, shape index: {}]
  %s2 = inlined_call_operand.hbm [shape: f32[1,128], index: 2, kind: input, shape index: {}]
  %s3 = inlined_call_operand.hbm [shape: bf16[128,384], index: 3, kind: input, shape index: {}]
  %s4 = inlined_call_operand.hbm [shape: f32[1,384], index: 4, kind: input, shape index: {}]
  %s5 = inlined_call_operand.hbm [shape: bf16[2,256,384], index: 5, kind: output, shape index: {}]
  %s6 = sld [smem:[#allocation0]]
  $region73: #{tpu_custom_call.1} parent=0
    _
  %s8 = ssub.s32 1, %s6
  %s9 = scalar_select 0, %s8, %s6
  $region1: #{tpu_custom_call.1} parent=0
    #allocation2 [shape = 'u8[131072]{0}', space=vmem, size = 0x20000, scoped, tag = 'input window, operand 0']
    #allocation3 [shape = 's32[2]{0}', space=sflag, size = 0x8, scoped, tag = 'scoped memory for tpu_custom_call.1']
    #allocation4 [shape = 's32[2]{0}', space=sflag, size = 0x8, scoped, tag = 'scoped memory for tpu_custom_call.1']
    #allocation5 [shape = 'u8[512]{0}', space=vmem, size = 0x400, scoped, tag = 'input window, operand 1, single buffered']
    #allocation6 [shape = 's32[1]{0}', space=sflag, size = 0x4, scoped, tag = 'scoped memory for tpu_custom_call.1']
    #allocation7 [shape = 'u8[512]{0}', space=vmem, size = 0x400, scoped, tag = 'input window, operand 2, single buffered']
    #allocation8 [shape = 'u8[98304]{0}', space=vmem, size = 0x18000, scoped, tag = 'input window, operand 3, single buffered']
    #allocation9 [shape = 's32[1]{0}', space=sflag, size = 0x4, scoped, tag = 'scoped memory for tpu_custom_call.1']
    #allocation10 [shape = 'u8[1536]{0}', space=vmem, size = 0x800, scoped, tag = 'input window, operand 4, single buffered']
    #allocation11 [shape = 'u8[196608]{0}', space=vmem, size = 0x30000, scoped, tag = 'output window, operand 0']
    %10 = vsyncpa [#allocation3], 0
    %s11 = scalar_lea.sflag [#allocation3], 1
    %12 = vsyncpa %s11, 0
    %13 = vsyncpa [#allocation6], 0
    %14 = vsyncpa [#allocation9], 0
    %15 = vsyncpa [#allocation4], 0
    %s16 = scalar_lea.sflag [#allocation4], 1
    %17 = vsyncpa %s16, 0
    loop: start=0, step=1, limit=6
    $region2: #{tpu_custom_call.1} parent=1 // loop_pre_header
      _
    $region3: #{tpu_custom_call.1} parent=1 // loop_header
      %s19 = sphi 0, %s23
      %p20 = scmp.ge.s32.totalorder %s19, 6
      %s26 = sphi 0, %s38
      %s27 = sphi 0, %s34
      %s28 = sphi 0, %s26
      %s29 = sphi 0, %s27
      %s30 = sphi 0, %s28
      %s31 = sphi 0, %s29
      %s43 = sphi 0, %s45
      %s46 = sphi 0, %s43
      %s47 = sphi 0, %s46
      %s63 = sphi 0, %s47
      %s67 = sphi 0, %s67
      %s69 = sphi 0, %s67
      %s70 = sphi 0, %s69
      %s84 = sphi 0, %s70
      %s88 = sphi 0, %s88
      %s90 = sphi 0, %s88
      %s91 = sphi 0, %s90
      %s105 = sphi 0, %s91
      %s109 = sphi 0, %s109
      %s111 = sphi 0, %s109
      %s112 = sphi 0, %s111
      %s126 = sphi 0, %s112
      %s130 = sphi 0, %s130
      %s132 = sphi 0, %s130
      %s133 = sphi 0, %s132
      %s147 = sphi 0, %s133
      %s155 = sphi 0, %s157
      %s158 = sphi 0, %s155
      %s159 = sphi 0, %s158
      %s175 = sphi 0, %s159
    $region4: #{tpu_custom_call.1} parent=1 // loop_header_branch
      %22 = sbr.rel (%p20) target = $region8
    $region5: #{tpu_custom_call.1} parent=1 // loop_body
      %s24 = ssub.s32 %s19, 1
      %s25 = ssub.s32 %s19, 2
      %s32 = sadd.s32 1, %s27
      %p33 = scmp.ge.s32.totalorder %s32, 2
      %s34 = scalar_select %p33, 0, %s32
      %s35 = sadd.s32 1, %s26
      %s36 = scalar_select %p33, %s35, %s26
      %p37 = scmp.ge.s32.totalorder %s36, 2
      %s38 = scalar_select %p37, 0, %s36
      %s39 = ssub.s32 %s26, %s38
      %s40 = ssub.s32 %s27, %s34
      %s41 = sor.u32 %s39, %s40
      %p42 = scmp.eq.s32.totalorder %s41, 0
      %s44 = sadd.s32 %s43, 1
      %s45 = scalar_select %p42, %s43, %s44
      %p48 = pneg %p42
      %p49 = scmp.eq.s32.totalorder %s19, 3
      %p50 = por %p48, %p49
      %p51 = scmp.ne.s32.totalorder %s43, %s46
      %p52 = scmp.eq.s32.totalorder %s19, 0
      %p53 = por %p51, %p52
      %p54 = scmp.ne.s32.totalorder %s43, %s46
      %p55 = scmp.eq.s32.totalorder %s24, 3
      %p56 = por %p54, %p55
      %p57 = scmp.ne.s32.totalorder %s46, %s47
      %p58 = scmp.eq.s32.totalorder %s24, 0
      %p59 = por %p57, %p58
      %p60 = scmp.ne.s32.totalorder %s46, %s47
      %p61 = scmp.eq.s32.totalorder %s25, 3
      %p62 = por %p60, %p61
      %p64 = scmp.ne.s32.totalorder %s47, %s63
      %p65 = scmp.eq.s32.totalorder %s25, 0
      %p66 = por %p64, %p65
      %s68 = sadd.s32 %s67, 1
      %p71 = scmp.eq.s32.totalorder %s19, 3
      %p72 = scmp.ne.s32.totalorder %s67, %s69
      %p73 = scmp.eq.s32.totalorder %s19, 0
      %p74 = por %p72, %p73
      %p75 = scmp.ne.s32.totalorder %s67, %s69
      %p76 = scmp.eq.s32.totalorder %s24, 3
      %p77 = por %p75, %p76
      %p78 = scmp.ne.s32.totalorder %s69, %s70
      %p79 = scmp.eq.s32.totalorder %s24, 0
      %p80 = por %p78, %p79
      %p81 = scmp.ne.s32.totalorder %s69, %s70
      %p82 = scmp.eq.s32.totalorder %s25, 3
      %p83 = por %p81, %p82
      %p85 = scmp.ne.s32.totalorder %s70, %s84
      %p86 = scmp.eq.s32.totalorder %s25, 0
      %p87 = por %p85, %p86
      %s89 = sadd.s32 %s88, 1
      %p92 = scmp.eq.s32.totalorder %s19, 3
      %p93 = scmp.ne.s32.totalorder %s88, %s90
      %p94 = scmp.eq.s32.totalorder %s19, 0
      %p95 = por %p93, %p94
      %p96 = scmp.ne.s32.totalorder %s88, %s90
      %p97 = scmp.eq.s32.totalorder %s24, 3
      %p98 = por %p96, %p97
      %p99 = scmp.ne.s32.totalorder %s90, %s91
      %p100 = scmp.eq.s32.totalorder %s24, 0
      %p101 = por %p99, %p100
      %p102 = scmp.ne.s32.totalorder %s90, %s91
      %p103 = scmp.eq.s32.totalorder %s25, 3
      %p104 = por %p102, %p103
      %p106 = scmp.ne.s32.totalorder %s91, %s105
      %p107 = scmp.eq.s32.totalorder %s25, 0
      %p108 = por %p106, %p107
      %s110 = sadd.s32 %s109, 1
      %p113 = scmp.eq.s32.totalorder %s19, 3
      %p114 = scmp.ne.s32.totalorder %s109, %s111
      %p115 = scmp.eq.s32.totalorder %s19, 0
      %p116 = por %p114, %p115
      %p117 = scmp.ne.s32.totalorder %s109, %s111
      %p118 = scmp.eq.s32.totalorder %s24, 3
      %p119 = por %p117, %p118
      %p120 = scmp.ne.s32.totalorder %s111, %s112
      %p121 = scmp.eq.s32.totalorder %s24, 0
      %p122 = por %p120, %p121
      %p123 = scmp.ne.s32.totalorder %s111, %s112
      %p124 = scmp.eq.s32.totalorder %s25, 3
      %p125 = por %p123, %p124
      %p127 = scmp.ne.s32.totalorder %s112, %s126
      %p128 = scmp.eq.s32.totalorder %s25, 0
      %p129 = por %p127, %p128
      %s131 = sadd.s32 %s130, 1
      %p134 = scmp.eq.s32.totalorder %s19, 3
      %p135 = scmp.ne.s32.totalorder %s130, %s132
      %p136 = scmp.eq.s32.totalorder %s19, 0
      %p137 = por %p135, %p136
      %p138 = scmp.ne.s32.totalorder %s130, %s132
      %p139 = scmp.eq.s32.totalorder %s24, 3
      %p140 = por %p138, %p139
      %p141 = scmp.ne.s32.totalorder %s132, %s133
      %p142 = scmp.eq.s32.totalorder %s24, 0
      %p143 = por %p141, %p142
      %p144 = scmp.ne.s32.totalorder %s132, %s133
      %p145 = scmp.eq.s32.totalorder %s25, 3
      %p146 = por %p144, %p145
      %p148 = scmp.ne.s32.totalorder %s133, %s147
      %p149 = scmp.eq.s32.totalorder %s25, 0
      %p150 = por %p148, %p149
      %s151 = ssub.s32 %s26, %s38
      %s152 = ssub.s32 %s27, %s34
      %s153 = sor.u32 %s151, %s152
      %p154 = scmp.eq.s32.totalorder %s153, 0
      %s156 = sadd.s32 %s155, 1
      %s157 = scalar_select %p154, %s155, %s156
      %p160 = pneg %p154
      %p161 = scmp.eq.s32.totalorder %s19, 3
      %p162 = por %p160, %p161
      %p163 = scmp.ne.s32.totalorder %s155, %s158
      %p164 = scmp.eq.s32.totalorder %s19, 0
      %p165 = por %p163, %p164
      %p166 = scmp.ne.s32.totalorder %s155, %s158
      %p167 = scmp.eq.s32.totalorder %s24, 3
      %p168 = por %p166, %p167
      %p169 = scmp.ne.s32.totalorder %s158, %s159
      %p170 = scmp.eq.s32.totalorder %s24, 0
      %p171 = por %p169, %p170
      %p172 = scmp.ne.s32.totalorder %s158, %s159
      %p173 = scmp.eq.s32.totalorder %s25, 3
      %p174 = por %p172, %p173
      %p176 = scmp.ne.s32.totalorder %s159, %s175
      %p177 = scmp.eq.s32.totalorder %s25, 0
      %p178 = por %p176, %p177
      %p179 = scmp.le.s32.totalorder 1, %s19
      %p180 = scmp.lt.s32.totalorder %s19, 5
      %p181 = pnand %p179, %p180
      %p182 = pneg %p181
      // Predicated region
      $region9: #{tpu_custom_call.1} parent=5 // pred_check
        _
      $region10: #{tpu_custom_call.1} parent=5 // pred_check_branch
        %184 = sbr.rel (%p181) target = $region12
      $region11: #{tpu_custom_call.1} parent=5 // pred_region
        %s185 = ssub.s32 %s19, 1
        // Predicated region
        $region13: #{tpu_custom_call.1} parent=11 // pred_check
          %p186 = pneg %p80
        $region14: #{tpu_custom_call.1} parent=11 // pred_check_branch
          %188 = sbr.rel (%p186) target = $region16
        $region15: #{tpu_custom_call.1} parent=11 // pred_region
          %s190 = ssub.s32 16, 16
          %191 = vsyncadd [#allocation6], %s190
          %s193 = sshll.u32 [#allocation5], 4
          %s194 = int_to_ptr.vmem [resolvable:$true] %s193
          %196 = dma.hbm_to_vmem [thread:$0]  %s1, 16, %s194, [#allocation6]
        $region16: #{tpu_custom_call.1} parent=11 // pred_fallthru
          _
        // Predicated region
        $region17: #{tpu_custom_call.1} parent=11 // pred_check
          %p197 = pneg %p101
        $region18: #{tpu_custom_call.1} parent=11 // pred_check_branch
          %199 = sbr.rel (%p197) target = $region20
        $region19: #{tpu_custom_call.1} parent=11 // pred_region
          %s201 = ssub.s32 16, 16
          %202 = vsyncadd [#allocation6], %s201
          %s204 = sshll.u32 [#allocation7], 4
          %s205 = int_to_ptr.vmem [resolvable:$true] %s204
          %207 = dma.hbm_to_vmem [thread:$0]  %s2, 16, %s205, [#allocation6]
        $region20: #{tpu_custom_call.1} parent=11 // pred_fallthru
          _
        // Predicated region
        $region21: #{tpu_custom_call.1} parent=11 // pred_check
          %p208 = pneg %p122
        $region22: #{tpu_custom_call.1} parent=11 // pred_check_branch
          %210 = sbr.rel (%p208) target = $region24
        $region23: #{tpu_custom_call.1} parent=11 // pred_region
          %s212 = ssub.s32 3072, 3072
          %213 = vsyncadd [#allocation9], %s212
          %s214 = sshll.u32 [#allocation8], 4
          %s215 = int_to_ptr.vmem [resolvable:$true] %s214
          %220 = dma.hbm_to_vmem [thread:$0]  %s3, 3072, %s215, [#allocation9], 192, 192, 12
        $region24: #{tpu_custom_call.1} parent=11 // pred_fallthru
          _
        // Predicated region
        $region25: #{tpu_custom_call.1} parent=11 // pred_check
          %p221 = pneg %p143
        $region26: #{tpu_custom_call.1} parent=11 // pred_check_branch
          %223 = sbr.rel (%p221) target = $region28
        $region27: #{tpu_custom_call.1} parent=11 // pred_region
          %s225 = ssub.s32 48, 48
          %226 = vsyncadd [#allocation9], %s225
          %s228 = sshll.u32 [#allocation10], 4
          %s229 = int_to_ptr.vmem [resolvable:$true] %s228
          %231 = dma.hbm_to_vmem [thread:$0]  %s4, 48, %s229, [#allocation9]
        $region28: #{tpu_custom_call.1} parent=11 // pred_fallthru
          _
      $region12: #{tpu_custom_call.1} parent=5 // pred_fallthru
        _
      %p232 = scmp.lt.s32.totalorder %s19, 4
      // Predicated region
      $region29: #{tpu_custom_call.1} parent=5 // pred_check
        %p233 = pneg %p232
      $region30: #{tpu_custom_call.1} parent=5 // pred_check_branch
        %235 = sbr.rel (%p233) target = $region32
      $region31: #{tpu_custom_call.1} parent=5 // pred_region
        // Predicated region
        $region33: #{tpu_custom_call.1} parent=31 // pred_check
          %p236 = pneg %p53
        $region34: #{tpu_custom_call.1} parent=31 // pred_check_branch
          %238 = sbr.rel (%p236) target = $region36
        $region35: #{tpu_custom_call.1} parent=31 // pred_region
          %s239 = sand.u32 %s43, 1
          %s240 = scalar_lea.sflag [#allocation3], %s239
          %s241 = sand.u32 %s43, 1
          %s242 = smul.addr %s241, 128
          %s243 = scalar_lea.vmem [#allocation2], %s242
          %s244 = smul.u32 16, %s27
          %s246 = ssub.s32 2048, 2048
          %247 = vsyncadd %s240, %s246
          %s248 = smul.addr %s26, 32
          %s249 = sadd.s32 %s244, %s248
          %s250 = smul.addr %s249, 128
          %s251 = scalar_lea.hbm %s0, %s250
          %s252 = sshll.u32 %s243, 4
          %s253 = int_to_ptr.vmem [resolvable:$true] %s252
          %258 = dma.hbm_to_vmem [thread:$0]  %s251, 2048, %s253, %s240, 128, 128, 8
        $region36: #{tpu_custom_call.1} parent=31 // pred_fallthru
          _
      $region32: #{tpu_custom_call.1} parent=5 // pred_fallthru
        _
      %p259 = scmp.le.s32.totalorder 1, %s19
      %p260 = scmp.lt.s32.totalorder %s19, 5
      %p261 = pnand %p259, %p260
      %p262 = pneg %p261
      // Predicated region
      $region37: #{tpu_custom_call.1} parent=5 // pred_check
        _
      $region38: #{tpu_custom_call.1} parent=5 // pred_check_branch
        %264 = sbr.rel (%p261) target = $region40
      $region39: #{tpu_custom_call.1} parent=5 // pred_region
        %s265 = ssub.s32 %s19, 1
        %s266 = sand.u32 %s46, 1
        %s267 = scalar_lea.sflag [#allocation3], %s266
        %s268 = sand.u32 %s46, 1
        %s269 = smul.addr %s268, 128
        %s270 = scalar_lea.vmem [#allocation2], %s269
        // Predicated region
        $region41: #{tpu_custom_call.1} parent=39 // pred_check
          %p271 = pneg %p59
        $region42: #{tpu_custom_call.1} parent=39 // pred_check_branch
          %273 = sbr.rel (%p271) target = $region44
        $region43: #{tpu_custom_call.1} parent=39 // pred_region
          %274 = dma.done %s267, 2048
        $region44: #{tpu_custom_call.1} parent=39 // pred_fallthru
          _
        // Predicated region
        $region45: #{tpu_custom_call.1} parent=39 // pred_check
          %p275 = pneg %p80
        $region46: #{tpu_custom_call.1} parent=39 // pred_check_branch
          %277 = sbr.rel (%p275) target = $region48
        $region47: #{tpu_custom_call.1} parent=39 // pred_region
          %278 = dma.done [#allocation6], 16
        $region48: #{tpu_custom_call.1} parent=39 // pred_fallthru
          _
        // Predicated region
        $region49: #{tpu_custom_call.1} parent=39 // pred_check
          %p279 = pneg %p101
        $region50: #{tpu_custom_call.1} parent=39 // pred_check_branch
          %281 = sbr.rel (%p279) target = $region52
        $region51: #{tpu_custom_call.1} parent=39 // pred_region
          %282 = dma.done [#allocation6], 16
        $region52: #{tpu_custom_call.1} parent=39 // pred_fallthru
          _
        // Predicated region
        $region53: #{tpu_custom_call.1} parent=39 // pred_check
          %p283 = pneg %p122
        $region54: #{tpu_custom_call.1} parent=39 // pred_check_branch
          %285 = sbr.rel (%p283) target = $region56
        $region55: #{tpu_custom_call.1} parent=39 // pred_region
          %286 = dma.done [#allocation9], 3072
        $region56: #{tpu_custom_call.1} parent=39 // pred_fallthru
          _
        // Predicated region
        $region57: #{tpu_custom_call.1} parent=39 // pred_check
          %p287 = pneg %p143
        $region58: #{tpu_custom_call.1} parent=39 // pred_check_branch
          %289 = sbr.rel (%p287) target = $region60
        $region59: #{tpu_custom_call.1} parent=39 // pred_region
          %290 = dma.done [#allocation9], 48
        $region60: #{tpu_custom_call.1} parent=39 // pred_fallthru
          _
        %s291 = sand.u32 %s46, 1
        %s292 = scalar_lea.sflag [#allocation3], %s291
        %s293 = sand.u32 %s46, 1
        %s294 = smul.addr %s293, 128
        %s295 = scalar_lea.vmem [#allocation2], %s294
        %p296 = pneg %p59
        %p297 = pneg %p56
        %p298 = pneg %p80
        %p299 = pneg %p77
        %p300 = pneg %p101
        %p301 = pneg %p98
        %p302 = pneg %p122
        %p303 = pneg %p119
        %p304 = pneg %p143
        %p305 = pneg %p140
        %p306 = pneg %p171
        %p307 = pneg %p168
        %s308 = sand.u32 %s158, 1
        %s309 = scalar_lea.sflag [#allocation4], %s308
        %s310 = sand.u32 %s158, 1
        %s311 = smul.addr %s310, 192
        %s312 = scalar_lea.vmem [#allocation11], %s311
        %s313 = smul.u32 16, %s29
        %s314 = smul.u32 16, %s29
        %v316 = vld [vmem:[%s270] sm:$0xff]
        %v317 = vld [vmem:[%s270 + $0x8] sm:$0xff]
        %v318 = vld [vmem:[%s270 + $0x10] sm:$0xff]
        %v319 = vld [vmem:[%s270 + $0x18] sm:$0xff]
        %v320 = vld [vmem:[%s270 + $0x20] sm:$0xff]
        %v321 = vld [vmem:[%s270 + $0x28] sm:$0xff]
        %v322 = vld [vmem:[%s270 + $0x30] sm:$0xff]
        %v323 = vld [vmem:[%s270 + $0x38] sm:$0xff]
        %v324 = vld [vmem:[%s270 + $0x40] sm:$0xff]
        %v325 = vld [vmem:[%s270 + $0x48] sm:$0xff]
        %v326 = vld [vmem:[%s270 + $0x50] sm:$0xff]
        %v327 = vld [vmem:[%s270 + $0x58] sm:$0xff]
        %v328 = vld [vmem:[%s270 + $0x60] sm:$0xff]
        %v329 = vld [vmem:[%s270 + $0x68] sm:$0xff]
        %v330 = vld [vmem:[%s270 + $0x70] sm:$0xff]
        %v331 = vld [vmem:[%s270 + $0x78] sm:$0xff]
        %v332 = vld [vmem:[#allocation5] sm:$0x1]
        %v333 = vld [vmem:[#allocation7] sm:$0x1]
        %334 = vadd.xlane.f32.xlu0 %v316
        %v335 = vpop.xlane.xlu0 %334
        %336 = vadd.xlane.f32.xlu0 %v317
        %v337 = vpop.xlane.xlu0 %336
        %338 = vadd.xlane.f32.xlu0 %v318
        %v339 = vpop.xlane.xlu0 %338
        %340 = vadd.xlane.f32.xlu0 %v319
        %v341 = vpop.xlane.xlu0 %340
        %342 = vadd.xlane.f32.xlu0 %v320
        %v343 = vpop.xlane.xlu0 %342
        %344 = vadd.xlane.f32.xlu0 %v321
        %v345 = vpop.xlane.xlu0 %344
        %346 = vadd.xlane.f32.xlu0 %v322
        %v347 = vpop.xlane.xlu0 %346
        %348 = vadd.xlane.f32.xlu0 %v323
        %v349 = vpop.xlane.xlu0 %348
        %350 = vadd.xlane.f32.xlu0 %v324
        %v351 = vpop.xlane.xlu0 %350
        %352 = vadd.xlane.f32.xlu0 %v325
        %v353 = vpop.xlane.xlu0 %352
        %354 = vadd.xlane.f32.xlu0 %v326
        %v355 = vpop.xlane.xlu0 %354
        %356 = vadd.xlane.f32.xlu0 %v327
        %v357 = vpop.xlane.xlu0 %356
        %358 = vadd.xlane.f32.xlu0 %v328
        %v359 = vpop.xlane.xlu0 %358
        %360 = vadd.xlane.f32.xlu0 %v329
        %v361 = vpop.xlane.xlu0 %360
        %362 = vadd.xlane.f32.xlu0 %v330
        %v363 = vpop.xlane.xlu0 %362
        %364 = vadd.xlane.f32.xlu0 %v331
        %v365 = vpop.xlane.xlu0 %364
        %v366 = vrcp.pop 128.0
        %v367 = vmul.f32 %v335, %v366
        %v368 = vmul.f32 %v337, %v366
        %v369 = vmul.f32 %v339, %v366
        %v370 = vmul.f32 %v341, %v366
        %v371 = vmul.f32 %v343, %v366
        %v372 = vmul.f32 %v345, %v366
        %v373 = vmul.f32 %v347, %v366
        %v374 = vmul.f32 %v349, %v366
        %v375 = vmul.f32 %v351, %v366
        %v376 = vmul.f32 %v353, %v366
        %v377 = vmul.f32 %v355, %v366
        %v378 = vmul.f32 %v357, %v366
        %v379 = vmul.f32 %v359, %v366
        %v380 = vmul.f32 %v361, %v366
        %v381 = vmul.f32 %v363, %v366
        %v382 = vmul.f32 %v365, %v366
        %v383 = vsub.f32 %v316, %v367
        %v384 = vsub.f32 %v317, %v368
        %v385 = vsub.f32 %v318, %v369
        %v386 = vsub.f32 %v319, %v370
        %v387 = vsub.f32 %v320, %v371
        %v388 = vsub.f32 %v321, %v372
        %v389 = vsub.f32 %v322, %v373
        %v390 = vsub.f32 %v323, %v374
        %v391 = vsub.f32 %v324, %v375
        %v392 = vsub.f32 %v325, %v376
        %v393 = vsub.f32 %v326, %v377
        %v394 = vsub.f32 %v327, %v378
        %v395 = vsub.f32 %v328, %v379
        %v396 = vsub.f32 %v329, %v380
        %v397 = vsub.f32 %v330, %v381
        %v398 = vsub.f32 %v331, %v382
        %v399 = vmul.f32 %v383, %v383
        %v400 = vmul.f32 %v384, %v384
        %v401 = vmul.f32 %v385, %v385
        %v402 = vmul.f32 %v386, %v386
        %v403 = vmul.f32 %v387, %v387
        %v404 = vmul.f32 %v388, %v388
        %v405 = vmul.f32 %v389, %v389
        %v406 = vmul.f32 %v390, %v390
        %v407 = vmul.f32 %v391, %v391
        %v408 = vmul.f32 %v392, %v392
        %v409 = vmul.f32 %v393, %v393
        %v410 = vmul.f32 %v394, %v394
        %v411 = vmul.f32 %v395, %v395
        %v412 = vmul.f32 %v396, %v396
        %v413 = vmul.f32 %v397, %v397
        %v414 = vmul.f32 %v398, %v398
        %415 = vadd.xlane.f32.xlu0 %v399
        %v416 = vpop.xlane.xlu0 %415
        %417 = vadd.xlane.f32.xlu0 %v400
        %v418 = vpop.xlane.xlu0 %417
        %419 = vadd.xlane.f32.xlu0 %v401
        %v420 = vpop.xlane.xlu0 %419
        %421 = vadd.xlane.f32.xlu0 %v402
        %v422 = vpop.xlane.xlu0 %421
        %423 = vadd.xlane.f32.xlu0 %v403
        %v424 = vpop.xlane.xlu0 %423
        %425 = vadd.xlane.f32.xlu0 %v404
        %v426 = vpop.xlane.xlu0 %425
        %427 = vadd.xlane.f32.xlu0 %v405
        %v428 = vpop.xlane.xlu0 %427
        %429 = vadd.xlane.f32.xlu0 %v406
        %v430 = vpop.xlane.xlu0 %429
        %431 = vadd.xlane.f32.xlu0 %v407
        %v432 = vpop.xlane.xlu0 %431
        %433 = vadd.xlane.f32.xlu0 %v408
        %v434 = vpop.xlane.xlu0 %433
        %435 = vadd.xlane.f32.xlu0 %v409
        %v436 = vpop.xlane.xlu0 %435
        %437 = vadd.xlane.f32.xlu0 %v410
        %v438 = vpop.xlane.xlu0 %437
        %439 = vadd.xlane.f32.xlu0 %v411
        %v440 = vpop.xlane.xlu0 %439
        %441 = vadd.xlane.f32.xlu0 %v412
        %v442 = vpop.xlane.xlu0 %441
        %443 = vadd.xlane.f32.xlu0 %v413
        %v444 = vpop.xlane.xlu0 %443
        %445 = vadd.xlane.f32.xlu0 %v414
        %v446 = vpop.xlane.xlu0 %445
        %v447 = vmul.f32 %v416, %v366
        %v448 = vmul.f32 %v418, %v366
        %v449 = vmul.f32 %v420, %v366
        %v450 = vmul.f32 %v422, %v366
        %v451 = vmul.f32 %v424, %v366
        %v452 = vmul.f32 %v426, %v366
        %v453 = vmul.f32 %v428, %v366
        %v454 = vmul.f32 %v430, %v366
        %v455 = vmul.f32 %v432, %v366
        %v456 = vmul.f32 %v434, %v366
        %v457 = vmul.f32 %v436, %v366
        %v458 = vmul.f32 %v438, %v366
        %v459 = vmul.f32 %v440, %v366
        %v460 = vmul.f32 %v442, %v366
        %v461 = vmul.f32 %v444, %v366
        %v462 = vmul.f32 %v446, %v366
        %v463 = vadd.f32 %v447, 1e-05
        %v464 = vadd.f32 %v448, 1e-05
        %v465 = vadd.f32 %v449, 1e-05
        %v466 = vadd.f32 %v450, 1e-05
        %v467 = vadd.f32 %v451, 1e-05
        %v468 = vadd.f32 %v452, 1e-05
        %v469 = vadd.f32 %v453, 1e-05
        %v470 = vadd.f32 %v454, 1e-05
        %v471 = vadd.f32 %v455, 1e-05
        %v472 = vadd.f32 %v456, 1e-05
        %v473 = vadd.f32 %v457, 1e-05
        %v474 = vadd.f32 %v458, 1e-05
        %v475 = vadd.f32 %v459, 1e-05
        %v476 = vadd.f32 %v460, 1e-05
        %v477 = vadd.f32 %v461, 1e-05
        %v478 = vadd.f32 %v462, 1e-05
        %v479 = vrsqrt.pop %v463
        %v480 = vrsqrt.pop %v464
        %v481 = vrsqrt.pop %v465
        %v482 = vrsqrt.pop %v466
        %v483 = vrsqrt.pop %v467
        %v484 = vrsqrt.pop %v468
        %v485 = vrsqrt.pop %v469
        %v486 = vrsqrt.pop %v470
        %v487 = vrsqrt.pop %v471
        %v488 = vrsqrt.pop %v472
        %v489 = vrsqrt.pop %v473
        %v490 = vrsqrt.pop %v474
        %v491 = vrsqrt.pop %v475
        %v492 = vrsqrt.pop %v476
        %v493 = vrsqrt.pop %v477
        %v494 = vrsqrt.pop %v478
        %v495 = vmul.f32 %v383, %v479
        %v496 = vmul.f32 %v384, %v480
        %v497 = vmul.f32 %v385, %v481
        %v498 = vmul.f32 %v386, %v482
        %v499 = vmul.f32 %v387, %v483
        %v500 = vmul.f32 %v388, %v484
        %v501 = vmul.f32 %v389, %v485
        %v502 = vmul.f32 %v390, %v486
        %v503 = vmul.f32 %v391, %v487
        %v504 = vmul.f32 %v392, %v488
        %v505 = vmul.f32 %v393, %v489
        %v506 = vmul.f32 %v394, %v490
        %v507 = vmul.f32 %v395, %v491
        %v508 = vmul.f32 %v396, %v492
        %v509 = vmul.f32 %v397, %v493
        %v510 = vmul.f32 %v398, %v494
        %v512 = vlaneseq
        %v513 = vshrl.u32 %v512, 7
        %v514 = vsub.s32 0, %v513
        %v515 = vrot.slane %v332, %v514
        %v517 = vmul.f32 %v495, %v515
        %v518 = vmul.f32 %v496, %v515
        %v519 = vmul.f32 %v497, %v515
        %v520 = vmul.f32 %v498, %v515
        %v521 = vmul.f32 %v499, %v515
        %v522 = vmul.f32 %v500, %v515
        %v523 = vmul.f32 %v501, %v515
        %v524 = vmul.f32 %v502, %v515
        %v525 = vmul.f32 %v503, %v515
        %v526 = vmul.f32 %v504, %v515
        %v527 = vmul.f32 %v505, %v515
        %v528 = vmul.f32 %v506, %v515
        %v529 = vmul.f32 %v507, %v515
        %v530 = vmul.f32 %v508, %v515
        %v531 = vmul.f32 %v509, %v515
        %v532 = vmul.f32 %v510, %v515
        %v534 = vlaneseq
        %v535 = vshrl.u32 %v534, 7
        %v536 = vsub.s32 0, %v535
        %v537 = vrot.slane %v333, %v536
        %v539 = vadd.f32 %v517, %v537
        %v540 = vadd.f32 %v518, %v537
        %v541 = vadd.f32 %v519, %v537
        %v542 = vadd.f32 %v520, %v537
        %v543 = vadd.f32 %v521, %v537
        %v544 = vadd.f32 %v522, %v537
        %v545 = vadd.f32 %v523, %v537
        %v546 = vadd.f32 %v524, %v537
        %v547 = vadd.f32 %v525, %v537
        %v548 = vadd.f32 %v526, %v537
        %v549 = vadd.f32 %v527, %v537
        %v550 = vadd.f32 %v528, %v537
        %v551 = vadd.f32 %v529, %v537
        %v552 = vadd.f32 %v530, %v537
        %v553 = vadd.f32 %v531, %v537
        %v554 = vadd.f32 %v532, %v537
        %v555 = vpack.c.bf16 %v540, %v539
        %v556 = vpack.c.bf16 %v542, %v541
        %v557 = vpack.c.bf16 %v544, %v543
        %v558 = vpack.c.bf16 %v546, %v545
        %v559 = vpack.c.bf16 %v548, %v547
        %v560 = vpack.c.bf16 %v550, %v549
        %v561 = vpack.c.bf16 %v552, %v551
        %v562 = vpack.c.bf16 %v554, %v553
        %v563 = vld [vmem:[#allocation8] sm:$0xff]
        %v564 = vld [vmem:[#allocation8 + $0x8] sm:$0xf]
        %v565 = vld [vmem:[#allocation8 + $0xc] sm:$0xff]
        %v566 = vld [vmem:[#allocation8 + $0x14] sm:$0xf]
        %v567 = vld [vmem:[#allocation8 + $0x18] sm:$0xff]
        %v568 = vld [vmem:[#allocation8 + $0x20] sm:$0xf]
        %v569 = vld [vmem:[#allocation8 + $0x24] sm:$0xff]
        %v570 = vld [vmem:[#allocation8 + $0x2c] sm:$0xf]
        %v571 = vld [vmem:[#allocation8 + $0x30] sm:$0xff]
        %v572 = vld [vmem:[#allocation8 + $0x38] sm:$0xf]
        %v573 = vld [vmem:[#allocation8 + $0x3c] sm:$0xff]
        %v574 = vld [vmem:[#allocation8 + $0x44] sm:$0xf]
        %v575 = vld [vmem:[#allocation8 + $0x48] sm:$0xff]
        %v576 = vld [vmem:[#allocation8 + $0x50] sm:$0xf]
        %v577 = vld [vmem:[#allocation8 + $0x54] sm:$0xff]
        %v578 = vld [vmem:[#allocation8 + $0x5c] sm:$0xf]
        %v579 = vld [vmem:[#allocation8 + $0x60] sm:$0xff]
        %v580 = vld [vmem:[#allocation8 + $0x68] sm:$0xf]
        %v581 = vld [vmem:[#allocation8 + $0x6c] sm:$0xff]
        %v582 = vld [vmem:[#allocation8 + $0x74] sm:$0xf]
        %v583 = vld [vmem:[#allocation8 + $0x78] sm:$0xff]
        %v584 = vld [vmem:[#allocation8 + $0x80] sm:$0xf]
        %v585 = vld [vmem:[#allocation8 + $0x84] sm:$0xff]
        %v586 = vld [vmem:[#allocation8 + $0x8c] sm:$0xf]
        %v587 = vld [vmem:[#allocation8 + $0x90] sm:$0xff]
        %v588 = vld [vmem:[#allocation8 + $0x98] sm:$0xf]
        %v589 = vld [vmem:[#allocation8 + $0x9c] sm:$0xff]
        %v590 = vld [vmem:[#allocation8 + $0xa4] sm:$0xf]
        %v591 = vld [vmem:[#allocation8 + $0xa8] sm:$0xff]
        %v592 = vld [vmem:[#allocation8 + $0xb0] sm:$0xf]
        %v593 = vld [vmem:[#allocation8 + $0xb4] sm:$0xff]
        %v594 = vld [vmem:[#allocation8 + $0xbc] sm:$0xf]
        %v595 = vld [vmem:[#allocation10] sm:$0x7]
        %v597 = vlaneseq
        %v598 = vshrl.u32 %v597, 7
        %v599 = vsub.s32 0, %v598
        %v600 = vrot.slane %v595, %v599
        %v601 = vlaneseq
        %v602 = vshrl.u32 %v601, 7
        %v603 = vsub.s32 1, %v602
        %v604 = vrot.slane %v595, %v603
        %v605 = vlaneseq
        %v606 = vshrl.u32 %v605, 7
        %v607 = vsub.s32 2, %v606
        %v608 = vrot.slane %v595, %v607
        %v644 = vunpack.c.l.b16 %v563
        %v645 = vunpack.c.h.b16 %v563
        %v646 = vunpack.c.l.b16 %v564
        %v647 = vunpack.c.l.b16 %v565
        %v648 = vunpack.c.h.b16 %v565
        %v649 = vunpack.c.l.b16 %v566
        %v650 = vunpack.c.l.b16 %v567
        %v651 = vunpack.c.h.b16 %v567
        %v652 = vunpack.c.l.b16 %v568
        %v653 = vunpack.c.l.b16 %v569
        %v654 = vunpack.c.h.b16 %v569
        %v655 = vunpack.c.l.b16 %v570
        %v656 = vunpack.c.l.b16 %v571
        %v657 = vunpack.c.h.b16 %v571
        %v658 = vunpack.c.l.b16 %v572
        %v659 = vunpack.c.l.b16 %v573
        %v660 = vunpack.c.h.b16 %v573
        %v661 = vunpack.c.l.b16 %v574
        %v662 = vunpack.c.l.b16 %v575
        %v663 = vunpack.c.h.b16 %v575
        %v664 = vunpack.c.l.b16 %v576
        %v665 = vunpack.c.l.b16 %v577
        %v666 = vunpack.c.h.b16 %v577
        %v667 = vunpack.c.l.b16 %v578
        %v668 = vunpack.c.l.b16 %v579
        %v669 = vunpack.c.h.b16 %v579
        %v670 = vunpack.c.l.b16 %v580
        %v671 = vunpack.c.l.b16 %v581
        %v672 = vunpack.c.h.b16 %v581
        %v673 = vunpack.c.l.b16 %v582
        %v674 = vunpack.c.l.b16 %v583
        %v675 = vunpack.c.h.b16 %v583
        %v676 = vunpack.c.l.b16 %v584
        %v677 = vunpack.c.l.b16 %v585
        %v678 = vunpack.c.h.b16 %v585
        %v679 = vunpack.c.l.b16 %v586
        %v680 = vunpack.c.l.b16 %v587
        %v681 = vunpack.c.h.b16 %v587
        %v682 = vunpack.c.l.b16 %v588
        %v683 = vunpack.c.l.b16 %v589
        %v684 = vunpack.c.h.b16 %v589
        %v685 = vunpack.c.l.b16 %v590
        %v686 = vunpack.c.l.b16 %v591
        %v687 = vunpack.c.h.b16 %v591
        %v688 = vunpack.c.l.b16 %v592
        %v689 = vunpack.c.l.b16 %v593
        %v690 = vunpack.c.h.b16 %v593
        %v691 = vunpack.c.l.b16 %v594
        %v692 = vpack.c.b16 %v647, %v644
        %v693 = vpack.c.b16 %v648, %v645
        %v694 = vpack.c.b16 %v649, %v646
        %v695 = vpack.c.b16 %v653, %v650
        %v696 = vpack.c.b16 %v654, %v651
        %v697 = vpack.c.b16 %v655, %v652
        %v698 = vpack.c.b16 %v659, %v656
        %v699 = vpack.c.b16 %v660, %v657
        %v700 = vpack.c.b16 %v661, %v658
        %v701 = vpack.c.b16 %v665, %v662
        %v702 = vpack.c.b16 %v666, %v663
        %v703 = vpack.c.b16 %v667, %v664
        %v704 = vpack.c.b16 %v671, %v668
        %v705 = vpack.c.b16 %v672, %v669
        %v706 = vpack.c.b16 %v673, %v670
        %v707 = vpack.c.b16 %v677, %v674
        %v708 = vpack.c.b16 %v678, %v675
        %v709 = vpack.c.b16 %v679, %v676
        %v710 = vpack.c.b16 %v683, %v680
        %v711 = vpack.c.b16 %v684, %v681
        %v712 = vpack.c.b16 %v685, %v682
        %v713 = vpack.c.b16 %v689, %v686
        %v714 = vpack.c.b16 %v690, %v687
        %v715 = vpack.c.b16 %v691, %v688
        %740 = vmatprep.subr.bf16.mxu0 %v693
        %741 = vmatpush1.bf16.msra.mxu0 %v692
        %742 = vmatprep.subr.bf16.mxu0 %v696
        %743 = vmatpush1.bf16.msra.mxu0 %v695
        %744 = vmatprep.subr.bf16.mxu0 %v699
        %745 = vmatpush1.bf16.msra.mxu0 %v698
        %746 = vmatprep.subr.bf16.mxu0 %v702
        %747 = vmatpush1.bf16.msra.mxu0 %v701
        %748 = vmatprep.subr.bf16.mxu0 %v705
        %749 = vmatpush1.bf16.msra.mxu0 %v704
        %750 = vmatprep.subr.bf16.mxu0 %v708
        %751 = vmatpush1.bf16.msra.mxu0 %v707
        %752 = vmatprep.subr.bf16.mxu0 %v711
        %753 = vmatpush1.bf16.msra.mxu0 %v710
        %754 = vmatprep.subr.bf16.mxu0 %v714
        %755 = vmatpush1.bf16.msra.mxu0 %v713
        %756 = vmatprep.subr.bf16.mxu0 0
        %757 = vmatpush1.bf16.msra.mxu0 0
        %758 = vmatprep.subr.bf16.mxu0 0
        %759 = vmatpush1.bf16.msra.mxu0 0
        %760 = vmatprep.subr.bf16.mxu0 0
        %761 = vmatpush1.bf16.msra.mxu0 0
        %762 = vmatprep.subr.bf16.mxu0 0
        %763 = vmatpush1.bf16.msra.mxu0 0
        %764 = vmatprep.subr.bf16.mxu0 0
        %765 = vmatpush1.bf16.msra.mxu0 0
        %766 = vmatprep.subr.bf16.mxu0 0
        %767 = vmatpush1.bf16.msra.mxu0 0
        %768 = vmatprep.subr.bf16.mxu0 0
        %769 = vmatpush1.bf16.msra.mxu0 0
        %770 = vmatprep.subr.bf16.mxu0 0
        %771 = vmatpush1.bf16.msra.mxu0 0
        %772 = vmatprep.mubr.bf16.mxu0 0
        %773 = vmatmul.mubr.bf16.gmra.mrb[0].mxu0 %v555
        %v774 = vpop.f32.mrb[0].mxu0
        %v775 = vadd.f32 %v600, %v774
        %v776 = vpop.f32.mrb[0].mxu0
        %v777 = vadd.f32 %v604, %v776
        %v778 = vpop.f32.mrb[0].mxu0
        %v779 = vadd.f32 %v600, %v778
        %v780 = vpop.f32.mrb[0].mxu0
        %v781 = vadd.f32 %v604, %v780
        %782 = vmatprep.mubr.bf16.mxu0 0
        %783 = vmatmul.mubr.bf16.gmra.mrb[0].mxu0 %v556
        %v784 = vpop.f32.mrb[0].mxu0
        %v785 = vadd.f32 %v600, %v784
        %v786 = vpop.f32.mrb[0].mxu0
        %v787 = vadd.f32 %v604, %v786
        %v788 = vpop.f32.mrb[0].mxu0
        %v789 = vadd.f32 %v600, %v788
        %v790 = vpop.f32.mrb[0].mxu0
        %v791 = vadd.f32 %v604, %v790
        %792 = vmatprep.mubr.bf16.mxu0 0
        %793 = vmatmul.mubr.bf16.gmra.mrb[0].mxu0 %v557
        %v794 = vpop.f32.mrb[0].mxu0
        %v795 = vadd.f32 %v600, %v794
        %v796 = vpop.f32.mrb[0].mxu0
        %v797 = vadd.f32 %v604, %v796
        %v798 = vpop.f32.mrb[0].mxu0
        %v799 = vadd.f32 %v600, %v798
        %v800 = vpop.f32.mrb[0].mxu0
        %v801 = vadd.f32 %v604, %v800
        %802 = vmatprep.mubr.bf16.mxu0 0
        %803 = vmatmul.mubr.bf16.gmra.mrb[0].mxu0 %v558
        %v804 = vpop.f32.mrb[0].mxu0
        %v805 = vadd.f32 %v600, %v804
        %v806 = vpop.f32.mrb[0].mxu0
        %v807 = vadd.f32 %v604, %v806
        %v808 = vpop.f32.mrb[0].mxu0
        %v809 = vadd.f32 %v600, %v808
        %v810 = vpop.f32.mrb[0].mxu0
        %v811 = vadd.f32 %v604, %v810
        %812 = vmatprep.mubr.bf16.mxu0 0
        %813 = vmatmul.mubr.bf16.gmra.mrb[0].mxu0 %v559
        %v814 = vpop.f32.mrb[0].mxu0
        %v815 = vadd.f32 %v600, %v814
        %v816 = vpop.f32.mrb[0].mxu0
        %v817 = vadd.f32 %v604, %v816
        %v818 = vpop.f32.mrb[0].mxu0
        %v819 = vadd.f32 %v600, %v818
        %v820 = vpop.f32.mrb[0].mxu0
        %v821 = vadd.f32 %v604, %v820
        %822 = vmatprep.mubr.bf16.mxu0 0
        %823 = vmatmul.mubr.bf16.gmra.mrb[0].mxu0 %v560
        %v824 = vpop.f32.mrb[0].mxu0
        %v825 = vadd.f32 %v600, %v824
        %v826 = vpop.f32.mrb[0].mxu0
        %v827 = vadd.f32 %v604, %v826
        %v828 = vpop.f32.mrb[0].mxu0
        %v829 = vadd.f32 %v600, %v828
        %v830 = vpop.f32.mrb[0].mxu0
        %v831 = vadd.f32 %v604, %v830
        %832 = vmatprep.mubr.bf16.mxu0 0
        %833 = vmatmul.mubr.bf16.gmra.mrb[0].mxu0 %v561
        %v834 = vpop.f32.mrb[0].mxu0
        %v835 = vadd.f32 %v600, %v834
        %v836 = vpop.f32.mrb[0].mxu0
        %v837 = vadd.f32 %v604, %v836
        %v838 = vpop.f32.mrb[0].mxu0
        %v839 = vadd.f32 %v600, %v838
        %v840 = vpop.f32.mrb[0].mxu0
        %v841 = vadd.f32 %v604, %v840
        %842 = vmatprep.mubr.bf16.mxu0 0
        %843 = vmatmul.mubr.bf16.gmra.mrb[0].mxu0 %v562
        %v844 = vpop.f32.mrb[0].mxu0
        %v845 = vadd.f32 %v600, %v844
        %v846 = vpop.f32.mrb[0].mxu0
        %v847 = vadd.f32 %v604, %v846
        %v848 = vpop.f32.mrb[0].mxu0
        %v849 = vadd.f32 %v600, %v848
        %v850 = vpop.f32.mrb[0].mxu0
        %v851 = vadd.f32 %v604, %v850
        %852 = vdwg.mxu0
        %853 = vmatprep.subr.bf16.mxu0 0
        %854 = vmatpush1.bf16.msra.mxu0 %v694
        %855 = vmatprep.subr.bf16.mxu0 0
        %856 = vmatpush1.bf16.msra.mxu0 %v697
        %857 = vmatprep.subr.bf16.mxu0 0
        %858 = vmatpush1.bf16.msra.mxu0 %v700
        %859 = vmatprep.subr.bf16.mxu0 0
        %860 = vmatpush1.bf16.msra.mxu0 %v703
        %861 = vmatprep.subr.bf16.mxu0 0
        %862 = vmatpush1.bf16.msra.mxu0 %v706
        %863 = vmatprep.subr.bf16.mxu0 0
        %864 = vmatpush1.bf16.msra.mxu0 %v709
        %865 = vmatprep.subr.bf16.mxu0 0
        %866 = vmatpush1.bf16.msra.mxu0 %v712
        %867 = vmatprep.subr.bf16.mxu0 0
        %868 = vmatpush1.bf16.msra.mxu0 %v715
        %869 = vmatprep.subr.bf16.mxu0 0
        %870 = vmatpush1.bf16.msra.mxu0 0
        %871 = vmatprep.subr.bf16.mxu0 0
        %872 = vmatpush1.bf16.msra.mxu0 0
        %873 = vmatprep.subr.bf16.mxu0 0
        %874 = vmatpush1.bf16.msra.mxu0 0
        %875 = vmatprep.subr.bf16.mxu0 0
        %876 = vmatpush1.bf16.msra.mxu0 0
        %877 = vmatprep.subr.bf16.mxu0 0
        %878 = vmatpush1.bf16.msra.mxu0 0
        %879 = vmatprep.subr.bf16.mxu0 0
        %880 = vmatpush1.bf16.msra.mxu0 0
        %881 = vmatprep.subr.bf16.mxu0 0
        %882 = vmatpush1.bf16.msra.mxu0 0
        %883 = vmatprep.subr.bf16.mxu0 0
        %884 = vmatpush1.bf16.msra.mxu0 0
        %885 = vmatprep.mubr.bf16.mxu0 0
        %886 = vmatmul.mubr.bf16.gmra.mrb[0].mxu0 %v555
        %v887 = vpop.f32.mrb[0].mxu0
        %v888 = vadd.f32 %v608, %v887
        %v889 = vpop.f32.mrb[0].mxu0
        %v890 = vpop.f32.mrb[0].mxu0
        %v891 = vadd.f32 %v608, %v890
        %v892 = vpop.f32.mrb[0].mxu0
        %893 = vmatprep.mubr.bf16.mxu0 0
        %894 = vmatmul.mubr.bf16.gmra.mrb[0].mxu0 %v556
        %v895 = vpop.f32.mrb[0].mxu0
        %v896 = vadd.f32 %v608, %v895
        %v897 = vpop.f32.mrb[0].mxu0
        %v898 = vpop.f32.mrb[0].mxu0
        %v899 = vadd.f32 %v608, %v898
        %v900 = vpop.f32.mrb[0].mxu0
        %901 = vmatprep.mubr.bf16.mxu0 0
        %902 = vmatmul.mubr.bf16.gmra.mrb[0].mxu0 %v557
        %v903 = vpop.f32.mrb[0].mxu0
        %v904 = vadd.f32 %v608, %v903
        %v905 = vpop.f32.mrb[0].mxu0
        %v906 = vpop.f32.mrb[0].mxu0
        %v907 = vadd.f32 %v608, %v906
        %v908 = vpop.f32.mrb[0].mxu0
        %909 = vmatprep.mubr.bf16.mxu0 0
        %910 = vmatmul.mubr.bf16.gmra.mrb[0].mxu0 %v558
        %v911 = vpop.f32.mrb[0].mxu0
        %v912 = vadd.f32 %v608, %v911
        %v913 = vpop.f32.mrb[0].mxu0
        %v914 = vpop.f32.mrb[0].mxu0
        %v915 = vadd.f32 %v608, %v914
        %v916 = vpop.f32.mrb[0].mxu0
        %917 = vmatprep.mubr.bf16.mxu0 0
        %918 = vmatmul.mubr.bf16.gmra.mrb[0].mxu0 %v559
        %v919 = vpop.f32.mrb[0].mxu0
        %v920 = vadd.f32 %v608, %v919
        %v921 = vpop.f32.mrb[0].mxu0
        %v922 = vpop.f32.mrb[0].mxu0
        %v923 = vadd.f32 %v608, %v922
        %v924 = vpop.f32.mrb[0].mxu0
        %925 = vmatprep.mubr.bf16.mxu0 0
        %926 = vmatmul.mubr.bf16.gmra.mrb[0].mxu0 %v560
        %v927 = vpop.f32.mrb[0].mxu0
        %v928 = vadd.f32 %v608, %v927
        %v929 = vpop.f32.mrb[0].mxu0
        %v930 = vpop.f32.mrb[0].mxu0
        %v931 = vadd.f32 %v608, %v930
        %v932 = vpop.f32.mrb[0].mxu0
        %933 = vmatprep.mubr.bf16.mxu0 0
        %934 = vmatmul.mubr.bf16.gmra.mrb[0].mxu0 %v561
        %v935 = vpop.f32.mrb[0].mxu0
        %v936 = vadd.f32 %v608, %v935
        %v937 = vpop.f32.mrb[0].mxu0
        %v938 = vpop.f32.mrb[0].mxu0
        %v939 = vadd.f32 %v608, %v938
        %v940 = vpop.f32.mrb[0].mxu0
        %941 = vmatprep.mubr.bf16.mxu0 0
        %942 = vmatmul.mubr.bf16.gmra.mrb[0].mxu0 %v562
        %v943 = vpop.f32.mrb[0].mxu0
        %v944 = vadd.f32 %v608, %v943
        %v945 = vpop.f32.mrb[0].mxu0
        %v946 = vpop.f32.mrb[0].mxu0
        %v947 = vadd.f32 %v608, %v946
        %v948 = vpop.f32.mrb[0].mxu0
        %949 = vdwg.mxu0
        %v950 = vlaneseq
        %v951 = vand.u32 %v950, 127
        %v952 = vadd.s32 %v951, 128
        %v953 = vadd.s32 %v951, 256
        %vm954 = vcmp.lt.s32.totalorder %v951, 128
        %vm955 = vcmp.lt.s32.totalorder %v952, 128
        %vm956 = vcmp.lt.s32.totalorder %v953, 128
        %v957 = vsel %vm954, 0.17677669, 1.0
        %v958 = vsel %vm955, 0.17677669, 1.0
        %v959 = vsel %vm956, 0.17677669, 1.0
        %v960 = vmul.f32 %v775, %v957
        %v961 = vmul.f32 %v777, %v958
        %v962 = vmul.f32 %v888, %v959
        %v963 = vmul.f32 %v779, %v957
        %v964 = vmul.f32 %v781, %v958
        %v965 = vmul.f32 %v891, %v959
        %v966 = vmul.f32 %v785, %v957
        %v967 = vmul.f32 %v787, %v958
        %v968 = vmul.f32 %v896, %v959
        %v969 = vmul.f32 %v789, %v957
        %v970 = vmul.f32 %v791, %v958
        %v971 = vmul.f32 %v899, %v959
        %v972 = vmul.f32 %v795, %v957
        %v973 = vmul.f32 %v797, %v958
        %v974 = vmul.f32 %v904, %v959
        %v975 = vmul.f32 %v799, %v957
        %v976 = vmul.f32 %v801, %v958
        %v977 = vmul.f32 %v907, %v959
        %v978 = vmul.f32 %v805, %v957
        %v979 = vmul.f32 %v807, %v958
        %v980 = vmul.f32 %v912, %v959
        %v981 = vmul.f32 %v809, %v957
        %v982 = vmul.f32 %v811, %v958
        %v983 = vmul.f32 %v915, %v959
        %v984 = vmul.f32 %v815, %v957
        %v985 = vmul.f32 %v817, %v958
        %v986 = vmul.f32 %v920, %v959
        %v987 = vmul.f32 %v819, %v957
        %v988 = vmul.f32 %v821, %v958
        %v989 = vmul.f32 %v923, %v959
        %v990 = vmul.f32 %v825, %v957
        %v991 = vmul.f32 %v827, %v958
        %v992 = vmul.f32 %v928, %v959
        %v993 = vmul.f32 %v829, %v957
        %v994 = vmul.f32 %v831, %v958
        %v995 = vmul.f32 %v931, %v959
        %v996 = vmul.f32 %v835, %v957
        %v997 = vmul.f32 %v837, %v958
        %v998 = vmul.f32 %v936, %v959
        %v999 = vmul.f32 %v839, %v957
        %v1000 = vmul.f32 %v841, %v958
        %v1001 = vmul.f32 %v939, %v959
        %v1002 = vmul.f32 %v845, %v957
        %v1003 = vmul.f32 %v847, %v958
        %v1004 = vmul.f32 %v944, %v959
        %v1005 = vmul.f32 %v849, %v957
        %v1006 = vmul.f32 %v851, %v958
        %v1007 = vmul.f32 %v947, %v959
        %v1008 = vpack.c.bf16 %v963, %v960
        %v1009 = vpack.c.bf16 %v964, %v961
        %v1010 = vpack.c.bf16 %v965, %v962
        %v1011 = vpack.c.bf16 %v969, %v966
        %v1012 = vpack.c.bf16 %v970, %v967
        %v1013 = vpack.c.bf16 %v971, %v968
        %v1014 = vpack.c.bf16 %v975, %v972
        %v1015 = vpack.c.bf16 %v976, %v973
        %v1016 = vpack.c.bf16 %v977, %v974
        %v1017 = vpack.c.bf16 %v981, %v978
        %v1018 = vpack.c.bf16 %v982, %v979
        %v1019 = vpack.c.bf16 %v983, %v980
        %v1020 = vpack.c.bf16 %v987, %v984
        %v1021 = vpack.c.bf16 %v988, %v985
        %v1022 = vpack.c.bf16 %v989, %v986
        %v1023 = vpack.c.bf16 %v993, %v990
        %v1024 = vpack.c.bf16 %v994, %v991
        %v1025 = vpack.c.bf16 %v995, %v992
        %v1026 = vpack.c.bf16 %v999, %v996
        %v1027 = vpack.c.bf16 %v1000, %v997
        %v1028 = vpack.c.bf16 %v1001, %v998
        %v1029 = vpack.c.bf16 %v1005, %v1002
        %v1030 = vpack.c.bf16 %v1006, %v1003
        %v1031 = vpack.c.bf16 %v1007, %v1004
        %v1056 = vunpack.c.l.b16 %v1008
        %v1057 = vunpack.c.l.b16 %v1009
        %v1058 = vunpack.c.l.b16 %v1010
        %v1059 = vunpack.c.h.b16 %v1008
        %v1060 = vunpack.c.h.b16 %v1009
        %v1061 = vunpack.c.h.b16 %v1010
        %v1062 = vunpack.c.l.b16 %v1011
        %v1063 = vunpack.c.l.b16 %v1012
        %v1064 = vunpack.c.l.b16 %v1013
        %v1065 = vunpack.c.h.b16 %v1011
        %v1066 = vunpack.c.h.b16 %v1012
        %v1067 = vunpack.c.h.b16 %v1013
        %v1068 = vunpack.c.l.b16 %v1014
        %v1069 = vunpack.c.l.b16 %v1015
        %v1070 = vunpack.c.l.b16 %v1016
        %v1071 = vunpack.c.h.b16 %v1014
        %v1072 = vunpack.c.h.b16 %v1015
        %v1073 = vunpack.c.h.b16 %v1016
        %v1074 = vunpack.c.l.b16 %v1017
        %v1075 = vunpack.c.l.b16 %v1018
        %v1076 = vunpack.c.l.b16 %v1019
        %v1077 = vunpack.c.h.b16 %v1017
        %v1078 = vunpack.c.h.b16 %v1018
        %v1079 = vunpack.c.h.b16 %v1019
        %v1080 = vunpack.c.l.b16 %v1020
        %v1081 = vunpack.c.l.b16 %v1021
        %v1082 = vunpack.c.l.b16 %v1022
        %v1083 = vunpack.c.h.b16 %v1020
        %v1084 = vunpack.c.h.b16 %v1021
        %v1085 = vunpack.c.h.b16 %v1022
        %v1086 = vunpack.c.l.b16 %v1023
        %v1087 = vunpack.c.l.b16 %v1024
        %v1088 = vunpack.c.l.b16 %v1025
        %v1089 = vunpack.c.h.b16 %v1023
        %v1090 = vunpack.c.h.b16 %v1024
        %v1091 = vunpack.c.h.b16 %v1025
        %v1092 = vunpack.c.l.b16 %v1026
        %v1093 = vunpack.c.l.b16 %v1027
        %v1094 = vunpack.c.l.b16 %v1028
        %v1095 = vunpack.c.h.b16 %v1026
        %v1096 = vunpack.c.h.b16 %v1027
        %v1097 = vunpack.c.h.b16 %v1028
        %v1098 = vunpack.c.l.b16 %v1029
        %v1099 = vunpack.c.l.b16 %v1030
        %v1100 = vunpack.c.l.b16 %v1031
        %v1101 = vunpack.c.h.b16 %v1029
        %v1102 = vunpack.c.h.b16 %v1030
        %v1103 = vunpack.c.h.b16 %v1031
        %v1104 = vpack.c.b16 %v1057, %v1056
        %v1105 = vpack.c.b16 %v1058, %v1058
        %v1106 = vpack.c.b16 %v1060, %v1059
        %v1107 = vpack.c.b16 %v1061, %v1061
        %v1108 = vpack.c.b16 %v1063, %v1062
        %v1109 = vpack.c.b16 %v1064, %v1064
        %v1110 = vpack.c.b16 %v1066, %v1065
        %v1111 = vpack.c.b16 %v1067, %v1067
        %v1112 = vpack.c.b16 %v1069, %v1068
        %v1113 = vpack.c.b16 %v1070, %v1070
        %v1114 = vpack.c.b16 %v1072, %v1071
        %v1115 = vpack.c.b16 %v1073, %v1073
        %v1116 = vpack.c.b16 %v1075, %v1074
        %v1117 = vpack.c.b16 %v1076, %v1076
        %v1118 = vpack.c.b16 %v1078, %v1077
        %v1119 = vpack.c.b16 %v1079, %v1079
        %v1120 = vpack.c.b16 %v1081, %v1080
        %v1121 = vpack.c.b16 %v1082, %v1082
        %v1122 = vpack.c.b16 %v1084, %v1083
        %v1123 = vpack.c.b16 %v1085, %v1085
        %v1124 = vpack.c.b16 %v1087, %v1086
        %v1125 = vpack.c.b16 %v1088, %v1088
        %v1126 = vpack.c.b16 %v1090, %v1089
        %v1127 = vpack.c.b16 %v1091, %v1091
        %v1128 = vpack.c.b16 %v1093, %v1092
        %v1129 = vpack.c.b16 %v1094, %v1094
        %v1130 = vpack.c.b16 %v1096, %v1095
        %v1131 = vpack.c.b16 %v1097, %v1097
        %v1132 = vpack.c.b16 %v1099, %v1098
        %v1133 = vpack.c.b16 %v1100, %v1100
        %v1134 = vpack.c.b16 %v1102, %v1101
        %v1135 = vpack.c.b16 %v1103, %v1103
        %1168 = vst [vmem:[%s312] sm:$0xff] %v1104
        %1169 = vst [vmem:[%s312 + $0x8] sm:$0xf] %v1105
        %1170 = vst [vmem:[%s312 + $0xc] sm:$0xff] %v1106
        %1171 = vst [vmem:[%s312 + $0x14] sm:$0xf] %v1107
        %1172 = vst [vmem:[%s312 + $0x18] sm:$0xff] %v1108
        %1173 = vst [vmem:[%s312 + $0x20] sm:$0xf] %v1109
        %1174 = vst [vmem:[%s312 + $0x24] sm:$0xff] %v1110
        %1175 = vst [vmem:[%s312 + $0x2c] sm:$0xf] %v1111
        %1176 = vst [vmem:[%s312 + $0x30] sm:$0xff] %v1112
        %1177 = vst [vmem:[%s312 + $0x38] sm:$0xf] %v1113
        %1178 = vst [vmem:[%s312 + $0x3c] sm:$0xff] %v1114
        %1179 = vst [vmem:[%s312 + $0x44] sm:$0xf] %v1115
        %1180 = vst [vmem:[%s312 + $0x48] sm:$0xff] %v1116
        %1181 = vst [vmem:[%s312 + $0x50] sm:$0xf] %v1117
        %1182 = vst [vmem:[%s312 + $0x54] sm:$0xff] %v1118
        %1183 = vst [vmem:[%s312 + $0x5c] sm:$0xf] %v1119
        %1184 = vst [vmem:[%s312 + $0x60] sm:$0xff] %v1120
        %1185 = vst [vmem:[%s312 + $0x68] sm:$0xf] %v1121
        %1186 = vst [vmem:[%s312 + $0x6c] sm:$0xff] %v1122
        %1187 = vst [vmem:[%s312 + $0x74] sm:$0xf] %v1123
        %1188 = vst [vmem:[%s312 + $0x78] sm:$0xff] %v1124
        %1189 = vst [vmem:[%s312 + $0x80] sm:$0xf] %v1125
        %1190 = vst [vmem:[%s312 + $0x84] sm:$0xff] %v1126
        %1191 = vst [vmem:[%s312 + $0x8c] sm:$0xf] %v1127
        %1192 = vst [vmem:[%s312 + $0x90] sm:$0xff] %v1128
        %1193 = vst [vmem:[%s312 + $0x98] sm:$0xf] %v1129
        %1194 = vst [vmem:[%s312 + $0x9c] sm:$0xff] %v1130
        %1195 = vst [vmem:[%s312 + $0xa4] sm:$0xf] %v1131
        %1196 = vst [vmem:[%s312 + $0xa8] sm:$0xff] %v1132
        %1197 = vst [vmem:[%s312 + $0xb0] sm:$0xf] %v1133
        %1198 = vst [vmem:[%s312 + $0xb4] sm:$0xff] %v1134
        %1199 = vst [vmem:[%s312 + $0xbc] sm:$0xf] %v1135
        %s1200 = sand.u32 %s158, 1
        %s1201 = scalar_lea.sflag [#allocation4], %s1200
        %s1202 = sand.u32 %s158, 1
        %s1203 = smul.addr %s1202, 192
        %s1204 = scalar_lea.vmem [#allocation11], %s1203
        // Predicated region
        $region61: #{tpu_custom_call.1} parent=39 // pred_check
          %p1205 = pneg %p168
        $region62: #{tpu_custom_call.1} parent=39 // pred_check_branch
          %1207 = sbr.rel (%p1205) target = $region64
        $region63: #{tpu_custom_call.1} parent=39 // pred_region
          %s1208 = smul.u32 16, %s29
          %s1210 = ssub.s32 3072, 3072
          %1211 = vsyncadd %s1201, %s1210
          %s1212 = smul.addr %s1208, 3
          %s1213 = smul.addr %s28, 96
          %s1214 = sadd.s32 %s1212, %s1213
          %s1215 = smul.addr %s1214, 64
          %s1216 = scalar_lea.hbm %s5, %s1215
          %s1217 = sshll.u32 %s1204, 4
          %s1218 = int_to_ptr.vmem [resolvable:$true] %s1217
          %1223 = dma.vmem_to_hbm [thread:$0]  %s1218, 3072, %s1216, %s1201, 192, 192, 12
        $region64: #{tpu_custom_call.1} parent=39 // pred_fallthru
          _
      $region40: #{tpu_custom_call.1} parent=5 // pred_fallthru
        _
      %p1224 = scmp.le.s32.totalorder 2, %s19
      // Predicated region
      $region65: #{tpu_custom_call.1} parent=5 // pred_check
        %p1225 = pneg %p1224
      $region66: #{tpu_custom_call.1} parent=5 // pred_check_branch
        %1227 = sbr.rel (%p1225) target = $region68
      $region67: #{tpu_custom_call.1} parent=5 // pred_region
        %s1228 = ssub.s32 %s19, 2
        // Predicated region
        $region69: #{tpu_custom_call.1} parent=67 // pred_check
          %p1229 = pneg %p174
        $region70: #{tpu_custom_call.1} parent=67 // pred_check_branch
          %1231 = sbr.rel (%p1229) target = $region72
        $region71: #{tpu_custom_call.1} parent=67 // pred_region
          %s1232 = sand.u32 %s159, 1
          %s1233 = scalar_lea.sflag [#allocation4], %s1232
          %s1234 = sand.u32 %s159, 1
          %s1235 = smul.addr %s1234, 192
          %s1236 = scalar_lea.vmem [#allocation11], %s1235
          %1237 = dma.done %s1233, 3072
        $region72: #{tpu_custom_call.1} parent=67 // pred_fallthru
          _
      $region68: #{tpu_custom_call.1} parent=5 // pred_fallthru
        _
    $region6: #{tpu_custom_call.1} parent=1 // loop_footer
      %s23 = sadd.s32 1, %s19
    $region7: #{tpu_custom_call.1} parent=1 // loop_footer_branch
      %18 = sbr.rel target = $region3
    $region8: #{tpu_custom_call.1} parent=1 // loop_exit
      _
    %1238 = vsyncpa [#allocation3], 1
    %s1239 = scalar_lea.sflag [#allocation3], 1
    %1240 = vsyncpa %s1239, 1
    %1241 = vsyncpa [#allocation6], 1
    %1242 = vsyncpa [#allocation9], 1
    %1243 = vsyncpa [#allocation4], 1
    %s1244 = scalar_lea.sflag [#allocation4], 1
    %1245 = vsyncpa %s1244, 1

</llo_original>
